<compile_context>
chip_gen: v7x
topology: tpu7x:2x2x1
jax: 0.10.0
libtpu: 0.0.40
codegen_flags: <defaults>
</compile_context>

<pallas_src>
import jax
import jax.numpy as jnp
from jax.experimental import pallas as pl
from jax.experimental.pallas import tpu as pltpu


# ---------------------------------------------------------------------------
# Pallas kernel: y[:, s] = hardswish( scale * (W @ x[:, s]) + bias )
# ---------------------------------------------------------------------------
def _focus_pointwise_kernel(x_ref, w_ref, scale_ref, bias_ref, o_ref):
    # x_ref:     (1, K, TS)  activation tile (lane dim = spatial, lane-dense)
    # w_ref:     (N, K) f32  raw 1x1 conv weight (resident across the grid)
    # scale_ref: (N, 1) f32  inference-BN scale  (resident)
    # bias_ref:  (N, 1) f32  inference-BN bias   (resident)
    # o_ref:     (1, N, TS)
    x = x_ref[0]                                              # (K, TS)
    w = w_ref[...]                                            # (N, K) f32
    if x.dtype != jnp.float32:
        # bf16 path: bf16 x bf16 on the MXU with f32 accumulation (no large
        # promoted f32 temporary of the activation tile).
        w = w.astype(x.dtype)
    y = jnp.dot(w, x, preferred_element_type=jnp.float32)     # (N, TS), f32 acc
    # Inference BN affine in f32 (scale never quantized to bf16); VPU is idle on
    # this memory-bound op, so the fused multiply-add is free.
    y = y * scale_ref[...] + bias_ref[...]
    # Hardswish: y * relu6(y + 3) / 6   (f32 VPU math; cast only at the store)
    y = y * jnp.clip(y + 3.0, 0.0, 6.0) * (1.0 / 6.0)
    o_ref[0] = y.astype(o_ref.dtype)


def _round_down_multiple(v, m):
    return max(m, (v // m) * m)


def focus_pointwise(x_bks, w_nk, scale_n1, bias_n1, *, out_dtype,
                    max_spatial_tile=65536,
                    vmem_budget_bytes=14 * 1024 * 1024):
    """x_bks: (B, K, S); w_nk: (N, K) f32; scale/bias: (N, 1) f32 -> (B, N, S)."""
    B, K, S = x_bks.shape
    N = w_nk.shape[0]
    in_sz = jnp.dtype(x_bks.dtype).itemsize
    out_sz = jnp.dtype(out_dtype).itemsize

    # --- Spatial tile sizing -------------------------------------------------
    # Per-lane VMEM cost: double-buffered input + output pipeline buffers plus a
    # conservative allowance for the f32 (N, TS) matmul/activation intermediates.
    per_lane_bytes = 2 * K * in_sz + 2 * N * out_sz + 3 * N * 4
    ts_cap = _round_down_multiple(
        min(max_spatial_tile, vmem_budget_bytes // per_lane_bytes), 128)
    # TS is a multiple of 128, or equal to the full S (both satisfy the lane-dim
    # BlockSpec constraint).
    TS = S if S <= ts_cap else ts_cap
    # v7x has 2 TensorCores sharded over "parallel" grid axes: make sure the grid
    # exposes >= 2 iterations when B == 1 (free on single-TC v5e/v6e).
    if B == 1 and TS >= S and S >= 256:
        TS = _round_down_multiple(S // 2, 128)

    grid = (B, pl.cdiv(S, TS))

    # Memory-bound cost hint for XLA's scheduler.
    cost = pl.CostEstimate(
        flops=2 * B * N * K * S,
        transcendentals=0,
        bytes_accessed=B * S * (K * in_sz + N * out_sz) + (N * K + 2 * N) * 4,
    )

    return pl.pallas_call(
        _focus_pointwise_kernel,
        out_shape=jax.ShapeDtypeStruct((B, N, S), out_dtype),
        grid=grid,
        in_specs=[
            pl.BlockSpec((1, K, TS), lambda b, s: (b, 0, s)),
            pl.BlockSpec((N, K), lambda b, s: (0, 0)),     # resident weight
            pl.BlockSpec((N, 1), lambda b, s: (0, 0)),     # resident BN scale
            pl.BlockSpec((N, 1), lambda b, s: (0, 0)),     # resident BN bias
        ],
        out_specs=pl.BlockSpec((1, N, TS), lambda b, s: (b, 0, s)),
        compiler_params=pltpu.CompilerParams(
            dimension_semantics=("parallel", "parallel")),
        cost_estimate=cost,
    )(x_bks, w_nk, scale_n1, bias_n1)


# ---------------------------------------------------------------------------
# Glue (plain JAX): Space2Depth + BN affine prep + free reshapes
# ---------------------------------------------------------------------------
def space2depth(x, bs):
    # Matches PyTorch: view(N,C,H//bs,bs,W//bs,bs).permute(0,3,5,1,2,4).view(...)
    n, c, h, w = x.shape
    x = x.reshape(n, c, h // bs, bs, w // bs, bs)
    x = jnp.transpose(x, (0, 3, 5, 1, 2, 4))               # (N, bs, bs, C, H', W')
    return x.reshape(n, c * bs * bs, h // bs, w // bs)


def focus_forward(x_nchw, conv_w, bn_gamma, bn_beta, bn_mean, bn_var,
                  block_size=2, num_down=1, eps=1e-5,
                  out_dtype=None, max_spatial_tile=65536):
    """Focus forward. x_nchw: (B, C, H, W). conv_w: (C_out, C_in*ratio_c, 1, 1).

    The kernel consumes the activation in the input's own dtype (pass a bf16 x to
    halve HBM traffic — recommended on v5e); out_dtype defaults to x.dtype.
    """
    assert conv_w.shape[2:] == (1, 1), "Focus kernel implements the 1x1 conv path"
    x = x_nchw
    for _ in range(num_down):
        x = space2depth(x, block_size)                      # (B, K, H', W')
    b, k, hp, wp = x.shape
    c_out = conv_w.shape[0]
    out_dtype = x.dtype if out_dtype is None else out_dtype

    # Inference BatchNorm as an f32 affine applied inside the kernel.
    inv = jax.lax.rsqrt(bn_var.astype(jnp.float32) + eps)
    scale = bn_gamma.astype(jnp.float32) * inv                               # (N,)
    bias = bn_beta.astype(jnp.float32) - bn_mean.astype(jnp.float32) * scale
    w_nk = conv_w[:, :, 0, 0].astype(jnp.float32)                            # (N, K)

    # (B, K, H', W') -> (B, K, S): free view of contiguous NCHW data; NO standalone
    # dtype-cast pass over the big activation is inserted here.
    x_bks = x.reshape(b, k, hp * wp)
    y_bns = focus_pointwise(x_bks, w_nk,
                            scale.reshape(c_out, 1), bias.reshape(c_out, 1),
                            out_dtype=out_dtype,
                            max_spatial_tile=max_spatial_tile)
    return y_bns.reshape(b, c_out, hp, wp)                  # NCHW out, free view


# ---------------------------------------------------------------------------
# Pure-JAX reference for sanity check
# ---------------------------------------------------------------------------
def focus_reference(x_nchw, conv_w, bn_gamma, bn_beta, bn_mean, bn_var,
                    block_size=2, num_down=1, eps=1e-5):
    x = x_nchw
    for _ in range(num_down):
        x = space2depth(x, block_size)
    y = jax.lax.conv_general_dilated(
        x.astype(jnp.float32), conv_w.astype(jnp.float32),
        window_strides=(1, 1), padding="VALID",
        dimension_numbers=("NCHW", "OIHW", "NCHW"))
    inv = 1.0 / jnp.sqrt(bn_var + eps)
    y = (y - bn_mean[None, :, None, None]) * (bn_gamma * inv)[None, :, None, None] \
        + bn_beta[None, :, None, None]
    return y * jnp.clip(y + 3.0, 0.0, 6.0) / 6.0


if __name__ == "__main__":
    key = jax.random.PRNGKey(0)
    k1, k2, k3, k4, k5, k6, k7, k8 = jax.random.split(key, 8)

    B, C_in, H, W = 2, 4, 16, 16
    block_size, num_down = 2, 1
    C_out = 8
    ratio_c = (block_size ** 2) ** num_down          # 4
    K = C_in * ratio_c                               # 16

    x = jax.random.normal(k1, (B, C_in, H, W), dtype=jnp.float32)
    conv_w = 0.1 * jax.random.normal(k2, (C_out, K, 1, 1), dtype=jnp.float32)
    bn_gamma = 1.0 + 0.05 * jax.random.normal(k3, (C_out,), dtype=jnp.float32)
    bn_beta = 0.05 * jax.random.normal(k4, (C_out,), dtype=jnp.float32)
    bn_mean = 0.05 * jax.random.normal(k5, (C_out,), dtype=jnp.float32)
    bn_var = jnp.abs(1.0 + 0.05 * jax.random.normal(k6, (C_out,), dtype=jnp.float32))

    # --- f32 path (exact check) ---
    out = focus_forward(x, conv_w, bn_gamma, bn_beta, bn_mean, bn_var,
                        block_size=block_size, num_down=num_down)
    out = jax.block_until_ready(out)
    ref = focus_reference(x, conv_w, bn_gamma, bn_beta, bn_mean, bn_var,
                          block_size=block_size, num_down=num_down)
    assert out.shape == (B, C_out, H // block_size, W // block_size), out.shape
    assert jnp.allclose(out, ref, atol=2e-5, rtol=1e-4), \
        float(jnp.max(jnp.abs(out - ref)))

    # --- multi-tile grid with a partial spatial tail (S=144, TS=128 -> 2 tiles) ---
    H2 = W2 = 24
    x2 = jax.random.normal(k7, (B, C_in, H2, W2), dtype=jnp.float32)
    out2 = focus_forward(x2, conv_w, bn_gamma, bn_beta, bn_mean, bn_var,
                         block_size=block_size, num_down=num_down,
                         max_spatial_tile=128)
    out2 = jax.block_until_ready(out2)
    ref2 = focus_reference(x2, conv_w, bn_gamma, bn_beta, bn_mean, bn_var,
                           block_size=block_size, num_down=num_down)
    assert jnp.allclose(out2, ref2, atol=2e-5, rtol=1e-4), \
        float(jnp.max(jnp.abs(out2 - ref2)))

    # --- B == 1 path: tile auto-split so the grid exposes >= 2 parallel steps ---
    H3 = W3 = 64                                       # S = 32*32 = 1024 -> TS = 512
    x3 = jax.random.normal(k8, (1, C_in, H3, W3), dtype=jnp.float32)
    out3 = focus_forward(x3, conv_w, bn_gamma, bn_beta, bn_mean, bn_var,
                         block_size=block_size, num_down=num_down)
    out3 = jax.block_until_ready(out3)
    ref3 = focus_reference(x3, conv_w, bn_gamma, bn_beta, bn_mean, bn_var,
                           block_size=block_size, num_down=num_down)
    assert jnp.allclose(out3, ref3, atol=2e-5, rtol=1e-4), \
        float(jnp.max(jnp.abs(out3 - ref3)))

    # --- bf16 I/O path (halved HBM traffic; f32 accumulate / BN / act in-kernel) ---
    out_bf16 = focus_forward(x.astype(jnp.bfloat16), conv_w, bn_gamma, bn_beta,
                             bn_mean, bn_var,
                             block_size=block_size, num_down=num_down)
    out_bf16 = jax.block_until_ready(out_bf16)
    assert out_bf16.dtype == jnp.bfloat16
    assert jnp.allclose(out_bf16.astype(jnp.float32), ref, atol=5e-2, rtol=5e-2), \
        float(jnp.max(jnp.abs(out_bf16.astype(jnp.float32) - ref)))

    print("KERNEL_OK")
</pallas_src>

<mosaic_0001>
module attributes {stable_mosaic.version = 11 : i64} {
  func.func @_focus_pointwise_kernel(%arg0: i32, %arg1: i32, %arg2: memref<1x16x64xf32, #tpu.memory_space<vmem>>, %arg3: memref<8x16xf32, #tpu.memory_space<vmem>>, %arg4: memref<8x1xf32, #tpu.memory_space<vmem>>, %arg5: memref<8x1xf32, #tpu.memory_space<vmem>>, %arg6: memref<1x8x64xf32, #tpu.memory_space<vmem>>) attributes {dimension_semantics = [#tpu.dimension_semantics<parallel>, #tpu.dimension_semantics<parallel>], iteration_bounds = array<i64: 2, 1>, scalar_prefetch = 0 : i64, scratch_operands = 0 : i64, tpu.core_type = #tpu.core_type<tc>, window_params = [{transform_indices = @transform_0, window_bounds = array<i64: 1, 16, 64>}, {pipeline_mode = #tpu.pipeline_mode<synchronous>, transform_indices = @transform_1, window_bounds = array<i64: 8, 16>}, {pipeline_mode = #tpu.pipeline_mode<synchronous>, transform_indices = @transform_2, window_bounds = array<i64: 8, 1>}, {pipeline_mode = #tpu.pipeline_mode<synchronous>, transform_indices = @transform_3, window_bounds = array<i64: 8, 1>}, {transform_indices = @transform_4, window_bounds = array<i64: 1, 8, 64>}]} {
    %c0 = arith.constant 0 : index
    %c0_0 = arith.constant 0 : index
    %c0_1 = arith.constant 0 : index
    %0 = vector.load %arg2[%c0, %c0_0, %c0_1] : memref<1x16x64xf32, #tpu.memory_space<vmem>>, vector<1x16x64xf32>
    %1 = vector.shape_cast %0 : vector<1x16x64xf32> to vector<16x64xf32>
    %c0_2 = arith.constant 0 : index
    %c0_3 = arith.constant 0 : index
    %2 = vector.load %arg3[%c0_2, %c0_3] : memref<8x16xf32, #tpu.memory_space<vmem>>, vector<8x16xf32>
    %cst = arith.constant dense<0.000000e+00> : vector<8x64xf32>
    %3 = tpu.matmul %2, %1, %cst {dimension_numbers = #tpu.dot_dimension_numbers<[1], [0], [0], [1], [0, 0, 1, 1], [], []>} : vector<8x16xf32>, vector<16x64xf32>, vector<8x64xf32> -> vector<8x64xf32>
    %c0_4 = arith.constant 0 : index
    %c0_5 = arith.constant 0 : index
    %4 = vector.load %arg4[%c0_4, %c0_5] : memref<8x1xf32, #tpu.memory_space<vmem>>, vector<8x1xf32>
    %5 = vector.broadcast %4 : vector<8x1xf32> to vector<8x64xf32>
    %6 = arith.mulf %3, %5 : vector<8x64xf32>
    %c0_6 = arith.constant 0 : index
    %c0_7 = arith.constant 0 : index
    %7 = vector.load %arg5[%c0_6, %c0_7] : memref<8x1xf32, #tpu.memory_space<vmem>>, vector<8x1xf32>
    %8 = vector.broadcast %7 : vector<8x1xf32> to vector<8x64xf32>
    %9 = arith.addf %6, %8 : vector<8x64xf32>
    %cst_8 = arith.constant 3.000000e+00 : f32
    %10 = vector.broadcast %cst_8 : f32 to vector<8x64xf32>
    %11 = arith.addf %9, %10 : vector<8x64xf32>
    %cst_9 = arith.constant 0.000000e+00 : f32
    %cst_10 = arith.constant 6.000000e+00 : f32
    %12 = vector.broadcast %cst_9 : f32 to vector<8x64xf32>
    %13 = arith.maximumf %12, %11 : vector<8x64xf32>
    %14 = vector.broadcast %cst_10 : f32 to vector<8x64xf32>
    %15 = arith.minimumf %14, %13 : vector<8x64xf32>
    %16 = arith.mulf %9, %15 : vector<8x64xf32>
    %cst_11 = arith.constant 0.166666672 : f32
    %17 = vector.broadcast %cst_11 : f32 to vector<8x64xf32>
    %18 = arith.mulf %16, %17 : vector<8x64xf32>
    %c0_12 = arith.constant 0 : index
    %c0_13 = arith.constant 0 : index
    %c0_14 = arith.constant 0 : index
    %19 = vector.load %arg6[%c0_12, %c0_13, %c0_14] : memref<1x8x64xf32, #tpu.memory_space<vmem>>, vector<1x8x64xf32>
    %20 = vector.shape_cast %19 : vector<1x8x64xf32> to vector<8x64xf32>
    %21 = vector.shape_cast %18 : vector<8x64xf32> to vector<1x8x64xf32>
    tpu.vector_store %arg6[%c0_12, %c0_13, %c0_14], %21 {strides = array<i32>} : memref<1x8x64xf32, #tpu.memory_space<vmem>>, vector<1x8x64xf32>,
    return
  }
  func.func @transform_0(%arg0: i32, %arg1: i32) -> (i32, i32, i32) {
    %c0_i32 = arith.constant 0 : i32
    %c0_i32_0 = arith.constant 0 : i32
    return %arg0, %c0_i32, %arg1 : i32, i32, i32
  }
  func.func @transform_1(%arg0: i32, %arg1: i32) -> (i32, i32) {
    %c0_i32 = arith.constant 0 : i32
    %c0_i32_0 = arith.constant 0 : i32
    %c0_i32_1 = arith.constant 0 : i32
    return %c0_i32, %c0_i32_0 : i32, i32
  }
  func.func @transform_2(%arg0: i32, %arg1: i32) -> (i32, i32) {
    %c0_i32 = arith.constant 0 : i32
    %c0_i32_0 = arith.constant 0 : i32
    %c0_i32_1 = arith.constant 0 : i32
    return %c0_i32, %c0_i32_0 : i32, i32
  }
  func.func @transform_3(%arg0: i32, %arg1: i32) -> (i32, i32) {
    %c0_i32 = arith.constant 0 : i32
    %c0_i32_0 = arith.constant 0 : i32
    %c0_i32_1 = arith.constant 0 : i32
    return %c0_i32, %c0_i32_0 : i32, i32
  }
  func.func @transform_4(%arg0: i32, %arg1: i32) -> (i32, i32, i32) {
    %c0_i32 = arith.constant 0 : i32
    %c0_i32_0 = arith.constant 0 : i32
    return %arg0, %c0_i32, %arg1 : i32, i32, i32
  }
}

</mosaic_0001>

<llo_original>
// kernel: tpu_custom_call.1
$region0: #{tpu_custom_call.1}
  #allocation0 [shape = 'u32[]', space=smem, size = 0x4, offset = 0x4, fixed_abs, tag = 'smem constant byte address 0x4 - core index']
  #allocation1 [shape = 'u32[144,128]{1,0:T(1,128)}', space=vmem, size = 0x12000, scoped, tag = 'internal scratch']
  %s0 = inlined_call_operand.hbm [shape: f32[2,16,64], index: 0, kind: input, shape index: {}]
  %s1 = inlined_call_operand.vmem [shape: f32[8,16], index: 1, kind: input, shape index: {}]
  %s2 = inlined_call_operand.vmem [shape: f32[8,1], index: 2, kind: input, shape index: {}]
  %s3 = inlined_call_operand.vmem [shape: f32[8,1], index: 3, kind: input, shape index: {}]
  %s4 = inlined_call_operand.hbm [shape: f32[2,8,64], index: 4, kind: output, shape index: {}]
  %s5 = sld [smem:[#allocation0]]
  $region53: #{tpu_custom_call.1} parent=0
    _
  %s7 = ssub.s32 1, %s5
  %s8 = scalar_select 0, %s7, %s5
  $region1: #{tpu_custom_call.1} parent=0
    #allocation2 [shape = 'u8[16384]{0}', space=vmem, size = 0x4000, scoped, tag = 'input window, operand 0']
    #allocation3 [shape = 's32[2]{0}', space=sflag, size = 0x8, scoped, tag = 'scoped memory for tpu_custom_call.1']
    #allocation4 [shape = 's32[2]{0}', space=sflag, size = 0x8, scoped, tag = 'scoped memory for tpu_custom_call.1']
    #allocation5 [shape = 'u8[8192]{0}', space=vmem, size = 0x2000, scoped, tag = 'output window, operand 0']
    %9 = vsyncpa [#allocation3], 0
    %s10 = scalar_lea.sflag [#allocation3], 1
    %11 = vsyncpa %s10, 0
    %12 = vsyncpa [#allocation4], 0
    %s13 = scalar_lea.sflag [#allocation4], 1
    %14 = vsyncpa %s13, 0
    loop: start=0, step=1, limit=4
    $region2: #{tpu_custom_call.1} parent=1 // loop_pre_header
      _
    $region3: #{tpu_custom_call.1} parent=1 // loop_header
      %s16 = sphi 0, %s20
      %p17 = scmp.ge.s32.totalorder %s16, 4
      %s23 = sphi 0, %s35
      %s24 = sphi 0, %s31
      %s25 = sphi 0, %s23
      %s26 = sphi 0, %s24
      %s27 = sphi 0, %s25
      %s28 = sphi 0, %s26
      %s40 = sphi 0, %s42
      %s43 = sphi 0, %s40
      %s44 = sphi 0, %s43
      %s60 = sphi 0, %s44
      %s64 = sphi 0, %s64
      %s66 = sphi 0, %s64
      %s67 = sphi 0, %s66
      %s81 = sphi 0, %s67
      %s85 = sphi 0, %s85
      %s87 = sphi 0, %s85
      %s88 = sphi 0, %s87
      %s102 = sphi 0, %s88
      %s106 = sphi 0, %s106
      %s108 = sphi 0, %s106
      %s109 = sphi 0, %s108
      %s123 = sphi 0, %s109
      %s131 = sphi 0, %s133
      %s134 = sphi 0, %s131
      %s135 = sphi 0, %s134
      %s151 = sphi 0, %s135
    $region4: #{tpu_custom_call.1} parent=1 // loop_header_branch
      %19 = sbr.rel (%p17) target = $region8
    $region5: #{tpu_custom_call.1} parent=1 // loop_body
      %s21 = ssub.s32 %s16, 1
      %s22 = ssub.s32 %s16, 2
      %s29 = sadd.s32 1, %s24
      %p30 = scmp.ge.s32.totalorder %s29, 1
      %s31 = scalar_select %p30, 0, %s29
      %s32 = sadd.s32 1, %s23
      %s33 = scalar_select %p30, %s32, %s23
      %p34 = scmp.ge.s32.totalorder %s33, 2
      %s35 = scalar_select %p34, 0, %s33
      %s36 = ssub.s32 %s23, %s35
      %s37 = ssub.s32 %s24, %s31
      %s38 = sor.u32 %s36, %s37
      %p39 = scmp.eq.s32.totalorder %s38, 0
      %s41 = sadd.s32 %s40, 1
      %s42 = scalar_select %p39, %s40, %s41
      %p45 = pneg %p39
      %p46 = scmp.eq.s32.totalorder %s16, 1
      %p47 = por %p45, %p46
      %p48 = scmp.ne.s32.totalorder %s40, %s43
      %p49 = scmp.eq.s32.totalorder %s16, 0
      %p50 = por %p48, %p49
      %p51 = scmp.ne.s32.totalorder %s40, %s43
      %p52 = scmp.eq.s32.totalorder %s21, 1
      %p53 = por %p51, %p52
      %p54 = scmp.ne.s32.totalorder %s43, %s44
      %p55 = scmp.eq.s32.totalorder %s21, 0
      %p56 = por %p54, %p55
      %p57 = scmp.ne.s32.totalorder %s43, %s44
      %p58 = scmp.eq.s32.totalorder %s22, 1
      %p59 = por %p57, %p58
      %p61 = scmp.ne.s32.totalorder %s44, %s60
      %p62 = scmp.eq.s32.totalorder %s22, 0
      %p63 = por %p61, %p62
      %s65 = sadd.s32 %s64, 1
      %p68 = scmp.eq.s32.totalorder %s16, 1
      %p69 = scmp.ne.s32.totalorder %s64, %s66
      %p70 = scmp.eq.s32.totalorder %s16, 0
      %p71 = por %p69, %p70
      %p72 = scmp.ne.s32.totalorder %s64, %s66
      %p73 = scmp.eq.s32.totalorder %s21, 1
      %p74 = por %p72, %p73
      %p75 = scmp.ne.s32.totalorder %s66, %s67
      %p76 = scmp.eq.s32.totalorder %s21, 0
      %p77 = por %p75, %p76
      %p78 = scmp.ne.s32.totalorder %s66, %s67
      %p79 = scmp.eq.s32.totalorder %s22, 1
      %p80 = por %p78, %p79
      %p82 = scmp.ne.s32.totalorder %s67, %s81
      %p83 = scmp.eq.s32.totalorder %s22, 0
      %p84 = por %p82, %p83
      %s86 = sadd.s32 %s85, 1
      %p89 = scmp.eq.s32.totalorder %s16, 1
      %p90 = scmp.ne.s32.totalorder %s85, %s87
      %p91 = scmp.eq.s32.totalorder %s16, 0
      %p92 = por %p90, %p91
      %p93 = scmp.ne.s32.totalorder %s85, %s87
      %p94 = scmp.eq.s32.totalorder %s21, 1
      %p95 = por %p93, %p94
      %p96 = scmp.ne.s32.totalorder %s87, %s88
      %p97 = scmp.eq.s32.totalorder %s21, 0
      %p98 = por %p96, %p97
      %p99 = scmp.ne.s32.totalorder %s87, %s88
      %p100 = scmp.eq.s32.totalorder %s22, 1
      %p101 = por %p99, %p100
      %p103 = scmp.ne.s32.totalorder %s88, %s102
      %p104 = scmp.eq.s32.totalorder %s22, 0
      %p105 = por %p103, %p104
      %s107 = sadd.s32 %s106, 1
      %p110 = scmp.eq.s32.totalorder %s16, 1
      %p111 = scmp.ne.s32.totalorder %s106, %s108
      %p112 = scmp.eq.s32.totalorder %s16, 0
      %p113 = por %p111, %p112
      %p114 = scmp.ne.s32.totalorder %s106, %s108
      %p115 = scmp.eq.s32.totalorder %s21, 1
      %p116 = por %p114, %p115
      %p117 = scmp.ne.s32.totalorder %s108, %s109
      %p118 = scmp.eq.s32.totalorder %s21, 0
      %p119 = por %p117, %p118
      %p120 = scmp.ne.s32.totalorder %s108, %s109
      %p121 = scmp.eq.s32.totalorder %s22, 1
      %p122 = por %p120, %p121
      %p124 = scmp.ne.s32.totalorder %s109, %s123
      %p125 = scmp.eq.s32.totalorder %s22, 0
      %p126 = por %p124, %p125
      %s127 = ssub.s32 %s23, %s35
      %s128 = ssub.s32 %s24, %s31
      %s129 = sor.u32 %s127, %s128
      %p130 = scmp.eq.s32.totalorder %s129, 0
      %s132 = sadd.s32 %s131, 1
      %s133 = scalar_select %p130, %s131, %s132
      %p136 = pneg %p130
      %p137 = scmp.eq.s32.totalorder %s16, 1
      %p138 = por %p136, %p137
      %p139 = scmp.ne.s32.totalorder %s131, %s134
      %p140 = scmp.eq.s32.totalorder %s16, 0
      %p141 = por %p139, %p140
      %p142 = scmp.ne.s32.totalorder %s131, %s134
      %p143 = scmp.eq.s32.totalorder %s21, 1
      %p144 = por %p142, %p143
      %p145 = scmp.ne.s32.totalorder %s134, %s135
      %p146 = scmp.eq.s32.totalorder %s21, 0
      %p147 = por %p145, %p146
      %p148 = scmp.ne.s32.totalorder %s134, %s135
      %p149 = scmp.eq.s32.totalorder %s22, 1
      %p150 = por %p148, %p149
      %p152 = scmp.ne.s32.totalorder %s135, %s151
      %p153 = scmp.eq.s32.totalorder %s22, 0
      %p154 = por %p152, %p153
      %p155 = scmp.le.s32.totalorder 1, %s16
      %p156 = scmp.lt.s32.totalorder %s16, 3
      %p157 = pnand %p155, %p156
      %p158 = pneg %p157
      // Predicated region
      $region9: #{tpu_custom_call.1} parent=5 // pred_check
        _
      $region10: #{tpu_custom_call.1} parent=5 // pred_check_branch
        %160 = sbr.rel (%p157) target = $region12
      $region11: #{tpu_custom_call.1} parent=5 // pred_region
        %s161 = ssub.s32 %s16, 1
        // Predicated region
        $region13: #{tpu_custom_call.1} parent=11 // pred_check
          %p162 = pneg %p77
        $region14: #{tpu_custom_call.1} parent=11 // pred_check_branch
          %164 = sbr.rel (%p162) target = $region16
        $region15: #{tpu_custom_call.1} parent=11 // pred_region
          _
        $region16: #{tpu_custom_call.1} parent=11 // pred_fallthru
          _
        // Predicated region
        $region17: #{tpu_custom_call.1} parent=11 // pred_check
          %p165 = pneg %p98
        $region18: #{tpu_custom_call.1} parent=11 // pred_check_branch
          %167 = sbr.rel (%p165) target = $region20
        $region19: #{tpu_custom_call.1} parent=11 // pred_region
          _
        $region20: #{tpu_custom_call.1} parent=11 // pred_fallthru
          _
        // Predicated region
        $region21: #{tpu_custom_call.1} parent=11 // pred_check
          %p168 = pneg %p119
        $region22: #{tpu_custom_call.1} parent=11 // pred_check_branch
          %170 = sbr.rel (%p168) target = $region24
        $region23: #{tpu_custom_call.1} parent=11 // pred_region
          _
        $region24: #{tpu_custom_call.1} parent=11 // pred_fallthru
          _
      $region12: #{tpu_custom_call.1} parent=5 // pred_fallthru
        _
      %p171 = scmp.lt.s32.totalorder %s16, 2
      // Predicated region
      $region25: #{tpu_custom_call.1} parent=5 // pred_check
        %p172 = pneg %p171
      $region26: #{tpu_custom_call.1} parent=5 // pred_check_branch
        %174 = sbr.rel (%p172) target = $region28
      $region27: #{tpu_custom_call.1} parent=5 // pred_region
        // Predicated region
        $region29: #{tpu_custom_call.1} parent=27 // pred_check
          %p175 = pneg %p50
        $region30: #{tpu_custom_call.1} parent=27 // pred_check_branch
          %177 = sbr.rel (%p175) target = $region32
        $region31: #{tpu_custom_call.1} parent=27 // pred_region
          %s178 = sand.u32 %s40, 1
          %s179 = scalar_lea.sflag [#allocation3], %s178
          %s180 = sand.u32 %s40, 1
          %s181 = smul.addr %s180, 16
          %s182 = scalar_lea.vmem [#allocation2], %s181
          %s184 = ssub.s32 256, 256
          %185 = vsyncadd %s179, %s184
          %s186 = smul.addr %s23, 2
          %s187 = sadd.s32 %s24, %s186
          %s188 = smul.addr %s187, 128
          %s189 = scalar_lea.hbm %s0, %s188
          %s190 = sshll.u32 %s182, 4
          %s191 = int_to_ptr.vmem [resolvable:$true] %s190
          %196 = dma.hbm_to_vmem [thread:$0]  %s189, 256, %s191, %s179, 128, 128, 8
        $region32: #{tpu_custom_call.1} parent=27 // pred_fallthru
          _
      $region28: #{tpu_custom_call.1} parent=5 // pred_fallthru
        _
      %p197 = scmp.le.s32.totalorder 1, %s16
      %p198 = scmp.lt.s32.totalorder %s16, 3
      %p199 = pnand %p197, %p198
      %p200 = pneg %p199
      // Predicated region
      $region33: #{tpu_custom_call.1} parent=5 // pred_check
        _
      $region34: #{tpu_custom_call.1} parent=5 // pred_check_branch
        %202 = sbr.rel (%p199) target = $region36
      $region35: #{tpu_custom_call.1} parent=5 // pred_region
        %s203 = ssub.s32 %s16, 1
        %s204 = sand.u32 %s43, 1
        %s205 = scalar_lea.sflag [#allocation3], %s204
        %s206 = sand.u32 %s43, 1
        %s207 = smul.addr %s206, 16
        %s208 = scalar_lea.vmem [#allocation2], %s207
        // Predicated region
        $region37: #{tpu_custom_call.1} parent=35 // pred_check
          %p209 = pneg %p56
        $region38: #{tpu_custom_call.1} parent=35 // pred_check_branch
          %211 = sbr.rel (%p209) target = $region40
        $region39: #{tpu_custom_call.1} parent=35 // pred_region
          %212 = dma.done %s205, 256
        $region40: #{tpu_custom_call.1} parent=35 // pred_fallthru
          _
        %s213 = sand.u32 %s43, 1
        %s214 = scalar_lea.sflag [#allocation3], %s213
        %s215 = sand.u32 %s43, 1
        %s216 = smul.addr %s215, 16
        %s217 = scalar_lea.vmem [#allocation2], %s216
        %p218 = pneg %p56
        %p219 = pneg %p53
        %p220 = pneg %p77
        %p221 = pneg %p74
        %p222 = pneg %p98
        %p223 = pneg %p95
        %p224 = pneg %p119
        %p225 = pneg %p116
        %p226 = pneg %p147
        %p227 = pneg %p144
        %s228 = sand.u32 %s134, 1
        %s229 = scalar_lea.sflag [#allocation4], %s228
        %s230 = sand.u32 %s134, 1
        %s231 = smul.addr %s230, 8
        %s232 = scalar_lea.vmem [#allocation5], %s231
        %v233 = vld [vmem:[%s208] sm:$0xff]
        %v234 = vld [vmem:[%s208 + $0x8] sm:$0xff]
        %v235 = vld [vmem:[%s1] sm:$0xff]
        %vm236 = vcmask 130048
        %v238 = vsel %vm236, %v235, 0
        %240 = vmatprep.subr.mxu0 0.0
        %241 = vmatpush1.msra.mxu0 %v233
        %242 = vmatprep.subr.mxu0 0.0
        %243 = vmatpush1.msra.mxu0 %v234
        %244 = vmatprep.subr.mxu0 0.0
        %245 = vmatpush1.msra.mxu0 0.0
        %246 = vmatprep.subr.mxu0 0.0
        %247 = vmatpush1.msra.mxu0 0.0
        %248 = vmatprep.subr.mxu0 0.0
        %249 = vmatpush1.msra.mxu0 0.0
        %250 = vmatprep.subr.mxu0 0.0
        %251 = vmatpush1.msra.mxu0 0.0
        %252 = vmatprep.subr.mxu0 0.0
        %253 = vmatpush1.msra.mxu0 0.0
        %254 = vmatprep.subr.mxu0 0.0
        %255 = vmatpush1.msra.mxu0 0.0
        %256 = vmatprep.subr.mxu0 0.0
        %257 = vmatpush1.msra.mxu0 0.0
        %258 = vmatprep.subr.mxu0 0.0
        %259 = vmatpush1.msra.mxu0 0.0
        %260 = vmatprep.subr.mxu0 0.0
        %261 = vmatpush1.msra.mxu0 0.0
        %262 = vmatprep.subr.mxu0 0.0
        %263 = vmatpush1.msra.mxu0 0.0
        %264 = vmatprep.subr.mxu0 0.0
        %265 = vmatpush1.msra.mxu0 0.0
        %266 = vmatprep.subr.mxu0 0.0
        %267 = vmatpush1.msra.mxu0 0.0
        %268 = vmatprep.subr.mxu0 0.0
        %269 = vmatpush1.msra.mxu0 0.0
        %270 = vmatprep.subr.mxu0 0.0
        %271 = vmatpush1.msra.mxu0 0.0
        %272 = vmatprep.subr.mxu0 0.0
        %273 = vmatpush1.msra.mxu0 0.0
        %274 = vmatprep.subr.mxu0 0.0
        %275 = vmatpush1.msra.mxu0 0.0
        %276 = vmatprep.subr.mxu0 0.0
        %277 = vmatpush1.msra.mxu0 0.0
        %278 = vmatprep.subr.mxu0 0.0
        %279 = vmatpush1.msra.mxu0 0.0
        %280 = vmatprep.subr.mxu0 0.0
        %281 = vmatpush1.msra.mxu0 0.0
        %282 = vmatprep.subr.mxu0 0.0
        %283 = vmatpush1.msra.mxu0 0.0
        %284 = vmatprep.subr.mxu0 0.0
        %285 = vmatpush1.msra.mxu0 0.0
        %286 = vmatprep.subr.mxu0 0.0
        %287 = vmatpush1.msra.mxu0 0.0
        %288 = vmatprep.subr.mxu0 0.0
        %289 = vmatpush1.msra.mxu0 0.0
        %290 = vmatprep.subr.mxu0 0.0
        %291 = vmatpush1.msra.mxu0 0.0
        %292 = vmatprep.subr.mxu0 0.0
        %293 = vmatpush1.msra.mxu0 0.0
        %294 = vmatprep.subr.mxu0 0.0
        %295 = vmatpush1.msra.mxu0 0.0
        %296 = vmatprep.subr.mxu0 0.0
        %297 = vmatpush1.msra.mxu0 0.0
        %298 = vmatprep.subr.mxu0 0.0
        %299 = vmatpush1.msra.mxu0 0.0
        %300 = vmatprep.subr.mxu0 0.0
        %301 = vmatpush1.msra.mxu0 0.0
        %302 = vmatprep.subr.mxu0 0.0
        %303 = vmatpush1.msra.mxu0 0.0
        %304 = vmatprep.mubr.f32.mxu0 0.0
        %305 = vmatmul.mubr.f32.gmra.mrb[0].mxu0 %v238
        %v306 = vpop.f32.mrb[0].mxu0
        %v307 = vadd.f32 0.0, %v306
        %v308 = vpop.f32.mrb[0].mxu0
        %309 = vdwg.mxu0
        %v310 = vld [vmem:[%s2] sm:$0xff]
        %312 = vset.pattern.permute.xlu0 0
        %313 = vperm.xlu0 %312, %v310
        %v314 = vpop.permute.xlu0 %313
        %v316 = vmul.f32 %v307, %v314
        %v317 = vld [vmem:[%s3] sm:$0xff]
        %319 = vset.pattern.permute.xlu0 0
        %320 = vperm.xlu0 %319, %v317
        %v321 = vpop.permute.xlu0 %320
        %v323 = vadd.f32 %v316, %v321
        %v324 = vadd.f32 %v323, 3.0
        %v325 = vmax.f32 %v324, 0.0
        %v326 = vmin.f32 %v325, 6.0
        %v327 = vmul.f32 %v323, %v326
        %v328 = vmul.f32 %v327, 0.16666667
        %vm329 = vcmask 523264
        %330 = vst.msk [vmem:[%s232] sm:$0xff] %vm329, %v328
        %s331 = sand.u32 %s134, 1
        %s332 = scalar_lea.sflag [#allocation4], %s331
        %s333 = sand.u32 %s134, 1
        %s334 = smul.addr %s333, 8
        %s335 = scalar_lea.vmem [#allocation5], %s334
        // Predicated region
        $region41: #{tpu_custom_call.1} parent=35 // pred_check
          %p336 = pneg %p144
        $region42: #{tpu_custom_call.1} parent=35 // pred_check_branch
          %338 = sbr.rel (%p336) target = $region44
        $region43: #{tpu_custom_call.1} parent=35 // pred_region
          %s340 = ssub.s32 128, 128
          %341 = vsyncadd %s332, %s340
          %s342 = sadd.s32 %s26, %s25
          %s343 = smul.addr %s342, 128
          %s344 = scalar_lea.hbm %s4, %s343
          %s346 = sshll.u32 %s335, 4
          %s347 = int_to_ptr.vmem [resolvable:$true] %s346
          %349 = dma.vmem_to_hbm [thread:$0]  %s347, 128, %s344, %s332
        $region44: #{tpu_custom_call.1} parent=35 // pred_fallthru
          _
      $region36: #{tpu_custom_call.1} parent=5 // pred_fallthru
        _
      %p350 = scmp.le.s32.totalorder 2, %s16
      // Predicated region
      $region45: #{tpu_custom_call.1} parent=5 // pred_check
        %p351 = pneg %p350
      $region46: #{tpu_custom_call.1} parent=5 // pred_check_branch
        %353 = sbr.rel (%p351) target = $region48
      $region47: #{tpu_custom_call.1} parent=5 // pred_region
        %s354 = ssub.s32 %s16, 2
        // Predicated region
        $region49: #{tpu_custom_call.1} parent=47 // pred_check
          %p355 = pneg %p150
        $region50: #{tpu_custom_call.1} parent=47 // pred_check_branch
          %357 = sbr.rel (%p355) target = $region52
        $region51: #{tpu_custom_call.1} parent=47 // pred_region
          %s358 = sand.u32 %s135, 1
          %s359 = scalar_lea.sflag [#allocation4], %s358
          %s360 = sand.u32 %s135, 1
          %s361 = smul.addr %s360, 8
          %s362 = scalar_lea.vmem [#allocation5], %s361
          %363 = dma.done %s359, 128
        $region52: #{tpu_custom_call.1} parent=47 // pred_fallthru
          _
      $region48: #{tpu_custom_call.1} parent=5 // pred_fallthru
        _
    $region6: #{tpu_custom_call.1} parent=1 // loop_footer
      %s20 = sadd.s32 1, %s16
    $region7: #{tpu_custom_call.1} parent=1 // loop_footer_branch
      %15 = sbr.rel target = $region3
    $region8: #{tpu_custom_call.1} parent=1 // loop_exit
      _
    %364 = vsyncpa [#allocation3], 1
    %s365 = scalar_lea.sflag [#allocation3], 1
    %366 = vsyncpa %s365, 1
    %367 = vsyncpa [#allocation4], 1
    %s368 = scalar_lea.sflag [#allocation4], 1
    %369 = vsyncpa %s368, 1

</llo_original>
